<compile_context>
chip_gen: v7x
topology: tpu7x:2x2x1
jax: 0.10.0
libtpu: 0.0.40
codegen_flags: <defaults>
</compile_context>

<pallas_src>
import math

import jax
import jax.numpy as jnp
from jax.experimental import pallas as pl
from jax.experimental.pallas import tpu as pltpu


def gcn_kernel(xt_ref, w1_ref, b1_ref, w2t_ref, o_ref):
    # xt_ref : (B, N, S)  input, state-last (lane = S)
    # w1_ref : (N, N)     conv1 weight (kernel dim squeezed)
    # b1_ref : (N, 1)     conv1 bias as a column over node rows
    # w2t_ref: (S, S)     conv2 weight, pre-transposed in the wrapper (= W2.T)
    # o_ref  : (B, N, S)  output, state-last (lane = S)
    w1 = w1_ref[...]
    b1 = b1_ref[...]
    w2t = w2t_ref[...]

    B = xt_ref.shape[0]
    for b in range(B):                      # B is tiny (static unroll)
        xb = xt_ref[b]                      # (N, S)
        # conv1 over the node axis: h_t[m, s] = sum_n w1[m, n] * x_t[n, s] + b1[m]
        hb = jnp.dot(w1, xb, preferred_element_type=jnp.float32) + b1
        # residual + ReLU
        hb = jnp.maximum(hb + xb, 0.0)
        # conv2 over the state axis: out_t[n, t] = sum_s h_t[n, s] * w2[t, s]
        ob = jnp.dot(hb, w2t, preferred_element_type=jnp.float32)  # (N, S)
        o_ref[b] = ob.astype(o_ref.dtype)


def gcn_forward(x, w1, b1, w2):
    B, S, N = x.shape
    assert w1.shape == (N, N)
    assert b1.shape == (1, N)
    assert w2.shape == (S, S)

    # Layout plumbing outside the kernel (cheap XLA ops, done once):
    xt = jnp.transpose(x, (0, 2, 1))        # (B, N, S): lane dim = S
    b1c = jnp.reshape(b1, (N, 1))           # column bias over node rows
    w2t = jnp.transpose(w2)                 # (S, S): MXU-natural (K, out)

    out_t = pl.pallas_call(
        gcn_kernel,
        out_shape=jax.ShapeDtypeStruct((B, N, S), x.dtype),
        in_specs=[
            pl.BlockSpec(memory_space=pltpu.MemorySpace.VMEM),  # xt
            pl.BlockSpec(memory_space=pltpu.MemorySpace.VMEM),  # w1
            pl.BlockSpec(memory_space=pltpu.MemorySpace.VMEM),  # b1
            pl.BlockSpec(memory_space=pltpu.MemorySpace.VMEM),  # w2t
        ],
        out_specs=pl.BlockSpec(memory_space=pltpu.MemorySpace.VMEM),
    )(xt, w1, b1c, w2t)

    return jnp.transpose(out_t, (0, 2, 1))  # back to (B, S, N)


def gcn_reference(x, w1, b1, w2):
    # Pure-JAX reference mirroring the PyTorch forward.
    h = jnp.einsum("bsn,mn->bsm", x, w1) + b1[None, :, :]   # conv1 over node axis
    h = jnp.maximum(h + x, 0.0)
    out = jnp.einsum("ts,bsn->btn", w2, h)                  # conv2 over state axis
    return out


def init_params(key, num_state, num_node, dtype=jnp.float32):
    """Deterministic Conv1d-style (kaiming-uniform-ish) init."""
    N = num_node + 1
    S = num_state
    k1, k2, k3 = jax.random.split(key, 3)
    # conv1: Conv1d(N, N, 1) -> weight (N, N, 1), bias (N,)
    bound1 = 1.0 / math.sqrt(N * 1)
    w1 = jax.random.uniform(k1, (N, N), dtype, minval=-bound1, maxval=bound1)
    b1 = jax.random.uniform(k2, (1, N), dtype, minval=-bound1, maxval=bound1)
    # conv2: Conv1d(S, S, 1, bias=False) -> weight (S, S, 1)
    bound2 = 1.0 / math.sqrt(S * 1)
    w2 = jax.random.uniform(k3, (S, S), dtype, minval=-bound2, maxval=bound2)
    return w1, b1, w2


if __name__ == "__main__":
    # Shapes consistent with GCN(num_state=32, num_node=8): x is (B, 32, 9).
    B, num_state, num_node = 2, 32, 8
    S, N = num_state, num_node + 1

    key = jax.random.PRNGKey(0)
    kx, kp = jax.random.split(key)
    x = jax.random.normal(kx, (B, S, N), jnp.float32)
    w1, b1, w2 = init_params(kp, num_state, num_node)

    out = jax.jit(gcn_forward)(x, w1, b1, w2)
    out = jax.block_until_ready(out)

    ref = gcn_reference(x, w1, b1, w2)
    assert out.shape == (B, S, N)
    assert jnp.allclose(out, ref, atol=1e-5, rtol=1e-5), "Pallas output mismatch vs reference"

    print("KERNEL_OK")
</pallas_src>

<mosaic_0001>
module attributes {stable_mosaic.version = 11 : i64} {
  func.func @gcn_kernel(%arg0: memref<2x9x32xf32, #tpu.memory_space<vmem>>, %arg1: memref<9x9xf32, #tpu.memory_space<vmem>>, %arg2: memref<9x1xf32, #tpu.memory_space<vmem>>, %arg3: memref<32x32xf32, #tpu.memory_space<vmem>>, %arg4: memref<2x9x32xf32, #tpu.memory_space<vmem>>) attributes {dimension_semantics = [], scalar_prefetch = 0 : i64, scratch_operands = 0 : i64, tpu.core_type = #tpu.core_type<tc>} {
    %c0 = arith.constant 0 : index
    %c0_0 = arith.constant 0 : index
    %0 = vector.load %arg1[%c0, %c0_0] : memref<9x9xf32, #tpu.memory_space<vmem>>, vector<9x9xf32>
    %c0_1 = arith.constant 0 : index
    %c0_2 = arith.constant 0 : index
    %1 = vector.load %arg2[%c0_1, %c0_2] : memref<9x1xf32, #tpu.memory_space<vmem>>, vector<9x1xf32>
    %c0_3 = arith.constant 0 : index
    %c0_4 = arith.constant 0 : index
    %2 = vector.load %arg3[%c0_3, %c0_4] : memref<32x32xf32, #tpu.memory_space<vmem>>, vector<32x32xf32>
    %c0_5 = arith.constant 0 : index
    %c0_6 = arith.constant 0 : index
    %c0_7 = arith.constant 0 : index
    %3 = vector.load %arg0[%c0_5, %c0_6, %c0_7] : memref<2x9x32xf32, #tpu.memory_space<vmem>>, vector<1x9x32xf32>
    %4 = vector.shape_cast %3 : vector<1x9x32xf32> to vector<9x32xf32>
    %cst = arith.constant dense<0.000000e+00> : vector<9x32xf32>
    %5 = tpu.matmul %0, %4, %cst {dimension_numbers = #tpu.dot_dimension_numbers<[1], [0], [0], [1], [0, 0, 1, 1], [], []>} : vector<9x9xf32>, vector<9x32xf32>, vector<9x32xf32> -> vector<9x32xf32>
    %6 = vector.broadcast %1 : vector<9x1xf32> to vector<9x32xf32>
    %7 = arith.addf %5, %6 : vector<9x32xf32>
    %8 = arith.addf %7, %4 : vector<9x32xf32>
    %cst_8 = arith.constant 0.000000e+00 : f32
    %9 = vector.broadcast %cst_8 : f32 to vector<9x32xf32>
    %10 = arith.maximumf %8, %9 : vector<9x32xf32>
    %cst_9 = arith.constant dense<0.000000e+00> : vector<9x32xf32>
    %11 = tpu.matmul %10, %2, %cst_9 {dimension_numbers = #tpu.dot_dimension_numbers<[1], [0], [0], [1], [0, 0, 1, 1], [], []>} : vector<9x32xf32>, vector<32x32xf32>, vector<9x32xf32> -> vector<9x32xf32>
    %c0_10 = arith.constant 0 : index
    %c0_11 = arith.constant 0 : index
    %c0_12 = arith.constant 0 : index
    %12 = vector.load %arg4[%c0_10, %c0_11, %c0_12] : memref<2x9x32xf32, #tpu.memory_space<vmem>>, vector<1x9x32xf32>
    %13 = vector.shape_cast %12 : vector<1x9x32xf32> to vector<9x32xf32>
    %14 = vector.shape_cast %11 : vector<9x32xf32> to vector<1x9x32xf32>
    tpu.vector_store %arg4[%c0_10, %c0_11, %c0_12], %14 {strides = array<i32>} : memref<2x9x32xf32, #tpu.memory_space<vmem>>, vector<1x9x32xf32>,
    %c1 = arith.constant 1 : index
    %c0_13 = arith.constant 0 : index
    %c0_14 = arith.constant 0 : index
    %15 = vector.load %arg0[%c1, %c0_13, %c0_14] : memref<2x9x32xf32, #tpu.memory_space<vmem>>, vector<1x9x32xf32>
    %16 = vector.shape_cast %15 : vector<1x9x32xf32> to vector<9x32xf32>
    %cst_15 = arith.constant dense<0.000000e+00> : vector<9x32xf32>
    %17 = tpu.matmul %0, %16, %cst_15 {dimension_numbers = #tpu.dot_dimension_numbers<[1], [0], [0], [1], [0, 0, 1, 1], [], []>} : vector<9x9xf32>, vector<9x32xf32>, vector<9x32xf32> -> vector<9x32xf32>
    %18 = vector.broadcast %1 : vector<9x1xf32> to vector<9x32xf32>
    %19 = arith.addf %17, %18 : vector<9x32xf32>
    %20 = arith.addf %19, %16 : vector<9x32xf32>
    %cst_16 = arith.constant 0.000000e+00 : f32
    %21 = vector.broadcast %cst_16 : f32 to vector<9x32xf32>
    %22 = arith.maximumf %20, %21 : vector<9x32xf32>
    %cst_17 = arith.constant dense<0.000000e+00> : vector<9x32xf32>
    %23 = tpu.matmul %22, %2, %cst_17 {dimension_numbers = #tpu.dot_dimension_numbers<[1], [0], [0], [1], [0, 0, 1, 1], [], []>} : vector<9x32xf32>, vector<32x32xf32>, vector<9x32xf32> -> vector<9x32xf32>
    %c1_18 = arith.constant 1 : index
    %c0_19 = arith.constant 0 : index
    %c0_20 = arith.constant 0 : index
    %24 = vector.load %arg4[%c1_18, %c0_19, %c0_20] : memref<2x9x32xf32, #tpu.memory_space<vmem>>, vector<1x9x32xf32>
    %25 = vector.shape_cast %24 : vector<1x9x32xf32> to vector<9x32xf32>
    %26 = vector.shape_cast %23 : vector<9x32xf32> to vector<1x9x32xf32>
    tpu.vector_store %arg4[%c1_18, %c0_19, %c0_20], %26 {strides = array<i32>} : memref<2x9x32xf32, #tpu.memory_space<vmem>>, vector<1x9x32xf32>,
    return
  }
}

</mosaic_0001>

<llo_original>
// kernel: gcn_forward.1
$region0: #{gcn_forward.1}
  #allocation0 [shape = 'u32[]', space=smem, size = 0x4, offset = 0x4, fixed_abs, tag = 'smem constant byte address 0x4 - core index']
  #allocation1 [shape = 'u32[144,128]{1,0:T(1,128)}', space=vmem, size = 0x12000, scoped, tag = 'internal scratch']
  %s0 = inlined_call_operand.vmem [shape: f32[2,9,32], index: 0, kind: input, shape index: {}]
  %s1 = inlined_call_operand.vmem [shape: f32[9,9], index: 1, kind: input, shape index: {}]
  %s2 = inlined_call_operand.vmem [shape: f32[9,1], index: 2, kind: input, shape index: {}]
  %s3 = inlined_call_operand.vmem [shape: f32[32,32], index: 3, kind: input, shape index: {}]
  %s4 = inlined_call_operand.vmem [shape: f32[2,9,32], index: 4, kind: output, shape index: {}]
  %s5 = sld [smem:[#allocation0]]
  $region26: #{gcn_forward.1} parent=0
    _
  %s7 = ssub.s32 1, %s5
  %s8 = scalar_select 0, %s7, %s5
  // Predicated region
  $region2: #{gcn_forward.1} parent=0 // pred_check
    _
  $region3: #{gcn_forward.1} parent=0 // pred_check_branch
    %10 = sbr.rel (0) target = $region5
  $region4: #{gcn_forward.1} parent=0 // pred_region
    _
  $region5: #{gcn_forward.1} parent=0 // pred_fallthru
    _
  // Predicated region
  $region6: #{gcn_forward.1} parent=0 // pred_check
    _
  $region7: #{gcn_forward.1} parent=0 // pred_check_branch
    %12 = sbr.rel (0) target = $region9
  $region8: #{gcn_forward.1} parent=0 // pred_region
    _
  $region9: #{gcn_forward.1} parent=0 // pred_fallthru
    _
  // Predicated region
  $region10: #{gcn_forward.1} parent=0 // pred_check
    _
  $region11: #{gcn_forward.1} parent=0 // pred_check_branch
    %14 = sbr.rel (0) target = $region13
  $region12: #{gcn_forward.1} parent=0 // pred_region
    _
  $region13: #{gcn_forward.1} parent=0 // pred_fallthru
    _
  // Predicated region
  $region14: #{gcn_forward.1} parent=0 // pred_check
    _
  $region15: #{gcn_forward.1} parent=0 // pred_check_branch
    %16 = sbr.rel (0) target = $region17
  $region16: #{gcn_forward.1} parent=0 // pred_region
    _
  $region17: #{gcn_forward.1} parent=0 // pred_fallthru
    _
  %v17 = vld [vmem:[%s1] sm:$0xff]
  %v18 = vld [vmem:[%s1 + $0x8] sm:$0x1]
  %v19 = vld [vmem:[%s2] sm:$0xff]
  %v20 = vld [vmem:[%s2 + $0x8] sm:$0x1]
  %v21 = vld [vmem:[%s3] sm:$0xff]
  %v22 = vld [vmem:[%s3 + $0x8] sm:$0xff]
  %v23 = vld [vmem:[%s3 + $0x10] sm:$0xff]
  %v24 = vld [vmem:[%s3 + $0x18] sm:$0xff]
  %v25 = vld [vmem:[%s0] sm:$0xff]
  %v26 = vld [vmem:[%s0 + $0x8] sm:$0x1]
  %28 = vset.pattern.permute.xlu0 0
  %29 = vperm.xlu0 %28, %v19
  %v30 = vpop.permute.xlu0 %29
  %33 = vset.pattern.permute.xlu0 0
  %34 = vperm.xlu0 %33, %v20
  %v35 = vpop.permute.xlu0 %34
  %vm37 = vcmask 72704
  %v39 = vsel %vm37, %v17, 0
  %v42 = vsel %vm37, %v18, 0
  %vm44 = vcmask 1040384
  %v46 = vsel %vm44, %v26, 0
  %48 = vmatprep.subr.mxu0 0.0
  %49 = vmatpush1.msra.mxu0 %v25
  %50 = vmatprep.subr.mxu0 0.0
  %51 = vmatpush1.msra.mxu0 %v46
  %52 = vmatprep.subr.mxu0 0.0
  %53 = vmatpush1.msra.mxu0 0.0
  %54 = vmatprep.subr.mxu0 0.0
  %55 = vmatpush1.msra.mxu0 0.0
  %56 = vmatprep.subr.mxu0 0.0
  %57 = vmatpush1.msra.mxu0 0.0
  %58 = vmatprep.subr.mxu0 0.0
  %59 = vmatpush1.msra.mxu0 0.0
  %60 = vmatprep.subr.mxu0 0.0
  %61 = vmatpush1.msra.mxu0 0.0
  %62 = vmatprep.subr.mxu0 0.0
  %63 = vmatpush1.msra.mxu0 0.0
  %64 = vmatprep.subr.mxu0 0.0
  %65 = vmatpush1.msra.mxu0 0.0
  %66 = vmatprep.subr.mxu0 0.0
  %67 = vmatpush1.msra.mxu0 0.0
  %68 = vmatprep.subr.mxu0 0.0
  %69 = vmatpush1.msra.mxu0 0.0
  %70 = vmatprep.subr.mxu0 0.0
  %71 = vmatpush1.msra.mxu0 0.0
  %72 = vmatprep.subr.mxu0 0.0
  %73 = vmatpush1.msra.mxu0 0.0
  %74 = vmatprep.subr.mxu0 0.0
  %75 = vmatpush1.msra.mxu0 0.0
  %76 = vmatprep.subr.mxu0 0.0
  %77 = vmatpush1.msra.mxu0 0.0
  %78 = vmatprep.subr.mxu0 0.0
  %79 = vmatpush1.msra.mxu0 0.0
  %80 = vmatprep.subr.mxu0 0.0
  %81 = vmatpush1.msra.mxu0 0.0
  %82 = vmatprep.subr.mxu0 0.0
  %83 = vmatpush1.msra.mxu0 0.0
  %84 = vmatprep.subr.mxu0 0.0
  %85 = vmatpush1.msra.mxu0 0.0
  %86 = vmatprep.subr.mxu0 0.0
  %87 = vmatpush1.msra.mxu0 0.0
  %88 = vmatprep.subr.mxu0 0.0
  %89 = vmatpush1.msra.mxu0 0.0
  %90 = vmatprep.subr.mxu0 0.0
  %91 = vmatpush1.msra.mxu0 0.0
  %92 = vmatprep.subr.mxu0 0.0
  %93 = vmatpush1.msra.mxu0 0.0
  %94 = vmatprep.subr.mxu0 0.0
  %95 = vmatpush1.msra.mxu0 0.0
  %96 = vmatprep.subr.mxu0 0.0
  %97 = vmatpush1.msra.mxu0 0.0
  %98 = vmatprep.subr.mxu0 0.0
  %99 = vmatpush1.msra.mxu0 0.0
  %100 = vmatprep.subr.mxu0 0.0
  %101 = vmatpush1.msra.mxu0 0.0
  %102 = vmatprep.subr.mxu0 0.0
  %103 = vmatpush1.msra.mxu0 0.0
  %104 = vmatprep.subr.mxu0 0.0
  %105 = vmatpush1.msra.mxu0 0.0
  %106 = vmatprep.subr.mxu0 0.0
  %107 = vmatpush1.msra.mxu0 0.0
  %108 = vmatprep.subr.mxu0 0.0
  %109 = vmatpush1.msra.mxu0 0.0
  %110 = vmatprep.subr.mxu0 0.0
  %111 = vmatpush1.msra.mxu0 0.0
  %112 = vmatprep.mubr.f32.mxu0 0.0
  %113 = vmatmul.mubr.f32.gmra.mrb[0].mxu0 %v39
  %v114 = vpop.f32.mrb[0].mxu0
  %v115 = vadd.f32 %v30, %v114
  %v116 = vpop.f32.mrb[0].mxu0
  %117 = vmatprep.mubr.f32.mxu0 0.0
  %118 = vmatmul.mubr.f32.gmra.mrb[0].mxu0 %v42
  %v119 = vpop.f32.mrb[0].mxu0
  %v120 = vadd.f32 %v35, %v119
  %v121 = vpop.f32.mrb[0].mxu0
  %122 = vdwg.mxu0
  %v123 = vadd.f32 %v115, %v25
  %v124 = vadd.f32 %v120, %v26
  %v125 = vmax.f32 %v123, 0.0
  %v126 = vmax.f32 %v124, 0.0
  %vm127 = vcmask 261120
  %v129 = vsel %vm127, %v125, 0
  %v132 = vsel %vm127, %v126, 0
  %134 = vmatprep.subr.mxu0 0.0
  %135 = vmatpush1.msra.mxu0 %v21
  %136 = vmatprep.subr.mxu0 0.0
  %137 = vmatpush1.msra.mxu0 %v22
  %138 = vmatprep.subr.mxu0 0.0
  %139 = vmatpush1.msra.mxu0 %v23
  %140 = vmatprep.subr.mxu0 0.0
  %141 = vmatpush1.msra.mxu0 %v24
  %142 = vmatprep.subr.mxu0 0.0
  %143 = vmatpush1.msra.mxu0 0.0
  %144 = vmatprep.subr.mxu0 0.0
  %145 = vmatpush1.msra.mxu0 0.0
  %146 = vmatprep.subr.mxu0 0.0
  %147 = vmatpush1.msra.mxu0 0.0
  %148 = vmatprep.subr.mxu0 0.0
  %149 = vmatpush1.msra.mxu0 0.0
  %150 = vmatprep.subr.mxu0 0.0
  %151 = vmatpush1.msra.mxu0 0.0
  %152 = vmatprep.subr.mxu0 0.0
  %153 = vmatpush1.msra.mxu0 0.0
  %154 = vmatprep.subr.mxu0 0.0
  %155 = vmatpush1.msra.mxu0 0.0
  %156 = vmatprep.subr.mxu0 0.0
  %157 = vmatpush1.msra.mxu0 0.0
  %158 = vmatprep.subr.mxu0 0.0
  %159 = vmatpush1.msra.mxu0 0.0
  %160 = vmatprep.subr.mxu0 0.0
  %161 = vmatpush1.msra.mxu0 0.0
  %162 = vmatprep.subr.mxu0 0.0
  %163 = vmatpush1.msra.mxu0 0.0
  %164 = vmatprep.subr.mxu0 0.0
  %165 = vmatpush1.msra.mxu0 0.0
  %166 = vmatprep.subr.mxu0 0.0
  %167 = vmatpush1.msra.mxu0 0.0
  %168 = vmatprep.subr.mxu0 0.0
  %169 = vmatpush1.msra.mxu0 0.0
  %170 = vmatprep.subr.mxu0 0.0
  %171 = vmatpush1.msra.mxu0 0.0
  %172 = vmatprep.subr.mxu0 0.0
  %173 = vmatpush1.msra.mxu0 0.0
  %174 = vmatprep.subr.mxu0 0.0
  %175 = vmatpush1.msra.mxu0 0.0
  %176 = vmatprep.subr.mxu0 0.0
  %177 = vmatpush1.msra.mxu0 0.0
  %178 = vmatprep.subr.mxu0 0.0
  %179 = vmatpush1.msra.mxu0 0.0
  %180 = vmatprep.subr.mxu0 0.0
  %181 = vmatpush1.msra.mxu0 0.0
  %182 = vmatprep.subr.mxu0 0.0
  %183 = vmatpush1.msra.mxu0 0.0
  %184 = vmatprep.subr.mxu0 0.0
  %185 = vmatpush1.msra.mxu0 0.0
  %186 = vmatprep.subr.mxu0 0.0
  %187 = vmatpush1.msra.mxu0 0.0
  %188 = vmatprep.subr.mxu0 0.0
  %189 = vmatpush1.msra.mxu0 0.0
  %190 = vmatprep.subr.mxu0 0.0
  %191 = vmatpush1.msra.mxu0 0.0
  %192 = vmatprep.subr.mxu0 0.0
  %193 = vmatpush1.msra.mxu0 0.0
  %194 = vmatprep.subr.mxu0 0.0
  %195 = vmatpush1.msra.mxu0 0.0
  %196 = vmatprep.subr.mxu0 0.0
  %197 = vmatpush1.msra.mxu0 0.0
  %198 = vmatprep.mubr.f32.mxu0 0.0
  %199 = vmatmul.mubr.f32.gmra.mrb[0].mxu0 %v129
  %v200 = vpop.f32.mrb[0].mxu0
  %v201 = vadd.f32 0.0, %v200
  %v202 = vpop.f32.mrb[0].mxu0
  %203 = vmatprep.mubr.f32.mxu0 0.0
  %204 = vmatmul.mubr.f32.gmra.mrb[0].mxu0 %v132
  %v205 = vpop.f32.mrb[0].mxu0
  %v206 = vadd.f32 0.0, %v205
  %v207 = vpop.f32.mrb[0].mxu0
  %208 = vdwg.mxu0
  %209 = vst.msk [vmem:[%s4] sm:$0xff] %vm127, %v201
  %vm210 = vcmask 253952
  %211 = vst.msk [vmem:[%s4 + $0x8] sm:$0x1] %vm210, %v206
  %s212 = scalar_lea.vmem %s0, 16
  %v213 = vld [vmem:[%s212] sm:$0xff]
  %v214 = vld [vmem:[%s212 + $0x8] sm:$0x1]
  %v216 = vsel %vm44, %v214, 0
  %218 = vmatprep.subr.mxu0 0.0
  %219 = vmatpush1.msra.mxu0 %v213
  %220 = vmatprep.subr.mxu0 0.0
  %221 = vmatpush1.msra.mxu0 %v216
  %222 = vmatprep.subr.mxu0 0.0
  %223 = vmatpush1.msra.mxu0 0.0
  %224 = vmatprep.subr.mxu0 0.0
  %225 = vmatpush1.msra.mxu0 0.0
  %226 = vmatprep.subr.mxu0 0.0
  %227 = vmatpush1.msra.mxu0 0.0
  %228 = vmatprep.subr.mxu0 0.0
  %229 = vmatpush1.msra.mxu0 0.0
  %230 = vmatprep.subr.mxu0 0.0
  %231 = vmatpush1.msra.mxu0 0.0
  %232 = vmatprep.subr.mxu0 0.0
  %233 = vmatpush1.msra.mxu0 0.0
  %234 = vmatprep.subr.mxu0 0.0
  %235 = vmatpush1.msra.mxu0 0.0
  %236 = vmatprep.subr.mxu0 0.0
  %237 = vmatpush1.msra.mxu0 0.0
  %238 = vmatprep.subr.mxu0 0.0
  %239 = vmatpush1.msra.mxu0 0.0
  %240 = vmatprep.subr.mxu0 0.0
  %241 = vmatpush1.msra.mxu0 0.0
  %242 = vmatprep.subr.mxu0 0.0
  %243 = vmatpush1.msra.mxu0 0.0
  %244 = vmatprep.subr.mxu0 0.0
  %245 = vmatpush1.msra.mxu0 0.0
  %246 = vmatprep.subr.mxu0 0.0
  %247 = vmatpush1.msra.mxu0 0.0
  %248 = vmatprep.subr.mxu0 0.0
  %249 = vmatpush1.msra.mxu0 0.0
  %250 = vmatprep.subr.mxu0 0.0
  %251 = vmatpush1.msra.mxu0 0.0
  %252 = vmatprep.subr.mxu0 0.0
  %253 = vmatpush1.msra.mxu0 0.0
  %254 = vmatprep.subr.mxu0 0.0
  %255 = vmatpush1.msra.mxu0 0.0
  %256 = vmatprep.subr.mxu0 0.0
  %257 = vmatpush1.msra.mxu0 0.0
  %258 = vmatprep.subr.mxu0 0.0
  %259 = vmatpush1.msra.mxu0 0.0
  %260 = vmatprep.subr.mxu0 0.0
  %261 = vmatpush1.msra.mxu0 0.0
  %262 = vmatprep.subr.mxu0 0.0
  %263 = vmatpush1.msra.mxu0 0.0
  %264 = vmatprep.subr.mxu0 0.0
  %265 = vmatpush1.msra.mxu0 0.0
  %266 = vmatprep.subr.mxu0 0.0
  %267 = vmatpush1.msra.mxu0 0.0
  %268 = vmatprep.subr.mxu0 0.0
  %269 = vmatpush1.msra.mxu0 0.0
  %270 = vmatprep.subr.mxu0 0.0
  %271 = vmatpush1.msra.mxu0 0.0
  %272 = vmatprep.subr.mxu0 0.0
  %273 = vmatpush1.msra.mxu0 0.0
  %274 = vmatprep.subr.mxu0 0.0
  %275 = vmatpush1.msra.mxu0 0.0
  %276 = vmatprep.subr.mxu0 0.0
  %277 = vmatpush1.msra.mxu0 0.0
  %278 = vmatprep.subr.mxu0 0.0
  %279 = vmatpush1.msra.mxu0 0.0
  %280 = vmatprep.subr.mxu0 0.0
  %281 = vmatpush1.msra.mxu0 0.0
  %282 = vmatprep.mubr.f32.mxu0 0.0
  %283 = vmatmul.mubr.f32.gmra.mrb[0].mxu0 %v39
  %v284 = vpop.f32.mrb[0].mxu0
  %v285 = vadd.f32 %v30, %v284
  %v286 = vpop.f32.mrb[0].mxu0
  %287 = vmatprep.mubr.f32.mxu0 0.0
  %288 = vmatmul.mubr.f32.gmra.mrb[0].mxu0 %v42
  %v289 = vpop.f32.mrb[0].mxu0
  %v290 = vadd.f32 %v35, %v289
  %v291 = vpop.f32.mrb[0].mxu0
  %292 = vdwg.mxu0
  %v293 = vadd.f32 %v285, %v213
  %v294 = vadd.f32 %v290, %v214
  %v295 = vmax.f32 %v293, 0.0
  %v296 = vmax.f32 %v294, 0.0
  %v298 = vsel %vm127, %v295, 0
  %v301 = vsel %vm127, %v296, 0
  %303 = vmatprep.subr.mxu0 0.0
  %304 = vmatpush1.msra.mxu0 %v21
  %305 = vmatprep.subr.mxu0 0.0
  %306 = vmatpush1.msra.mxu0 %v22
  %307 = vmatprep.subr.mxu0 0.0
  %308 = vmatpush1.msra.mxu0 %v23
  %309 = vmatprep.subr.mxu0 0.0
  %310 = vmatpush1.msra.mxu0 %v24
  %311 = vmatprep.subr.mxu0 0.0
  %312 = vmatpush1.msra.mxu0 0.0
  %313 = vmatprep.subr.mxu0 0.0
  %314 = vmatpush1.msra.mxu0 0.0
  %315 = vmatprep.subr.mxu0 0.0
  %316 = vmatpush1.msra.mxu0 0.0
  %317 = vmatprep.subr.mxu0 0.0
  %318 = vmatpush1.msra.mxu0 0.0
  %319 = vmatprep.subr.mxu0 0.0
  %320 = vmatpush1.msra.mxu0 0.0
  %321 = vmatprep.subr.mxu0 0.0
  %322 = vmatpush1.msra.mxu0 0.0
  %323 = vmatprep.subr.mxu0 0.0
  %324 = vmatpush1.msra.mxu0 0.0
  %325 = vmatprep.subr.mxu0 0.0
  %326 = vmatpush1.msra.mxu0 0.0
  %327 = vmatprep.subr.mxu0 0.0
  %328 = vmatpush1.msra.mxu0 0.0
  %329 = vmatprep.subr.mxu0 0.0
  %330 = vmatpush1.msra.mxu0 0.0
  %331 = vmatprep.subr.mxu0 0.0
  %332 = vmatpush1.msra.mxu0 0.0
  %333 = vmatprep.subr.mxu0 0.0
  %334 = vmatpush1.msra.mxu0 0.0
  %335 = vmatprep.subr.mxu0 0.0
  %336 = vmatpush1.msra.mxu0 0.0
  %337 = vmatprep.subr.mxu0 0.0
  %338 = vmatpush1.msra.mxu0 0.0
  %339 = vmatprep.subr.mxu0 0.0
  %340 = vmatpush1.msra.mxu0 0.0
  %341 = vmatprep.subr.mxu0 0.0
  %342 = vmatpush1.msra.mxu0 0.0
  %343 = vmatprep.subr.mxu0 0.0
  %344 = vmatpush1.msra.mxu0 0.0
  %345 = vmatprep.subr.mxu0 0.0
  %346 = vmatpush1.msra.mxu0 0.0
  %347 = vmatprep.subr.mxu0 0.0
  %348 = vmatpush1.msra.mxu0 0.0
  %349 = vmatprep.subr.mxu0 0.0
  %350 = vmatpush1.msra.mxu0 0.0
  %351 = vmatprep.subr.mxu0 0.0
  %352 = vmatpush1.msra.mxu0 0.0
  %353 = vmatprep.subr.mxu0 0.0
  %354 = vmatpush1.msra.mxu0 0.0
  %355 = vmatprep.subr.mxu0 0.0
  %356 = vmatpush1.msra.mxu0 0.0
  %357 = vmatprep.subr.mxu0 0.0
  %358 = vmatpush1.msra.mxu0 0.0
  %359 = vmatprep.subr.mxu0 0.0
  %360 = vmatpush1.msra.mxu0 0.0
  %361 = vmatprep.subr.mxu0 0.0
  %362 = vmatpush1.msra.mxu0 0.0
  %363 = vmatprep.subr.mxu0 0.0
  %364 = vmatpush1.msra.mxu0 0.0
  %365 = vmatprep.subr.mxu0 0.0
  %366 = vmatpush1.msra.mxu0 0.0
  %367 = vmatprep.mubr.f32.mxu0 0.0
  %368 = vmatmul.mubr.f32.gmra.mrb[0].mxu0 %v298
  %v369 = vpop.f32.mrb[0].mxu0
  %v370 = vadd.f32 0.0, %v369
  %v371 = vpop.f32.mrb[0].mxu0
  %372 = vmatprep.mubr.f32.mxu0 0.0
  %373 = vmatmul.mubr.f32.gmra.mrb[0].mxu0 %v301
  %v374 = vpop.f32.mrb[0].mxu0
  %v375 = vadd.f32 0.0, %v374
  %v376 = vpop.f32.mrb[0].mxu0
  %377 = vdwg.mxu0
  %s378 = scalar_lea.vmem %s4, 16
  %379 = vst.msk [vmem:[%s378] sm:$0xff] %vm127, %v370
  %380 = vst.msk [vmem:[%s378 + $0x8] sm:$0x1] %vm210, %v375
  // Predicated region
  $region18: #{gcn_forward.1} parent=0 // pred_check
    _
  $region19: #{gcn_forward.1} parent=0 // pred_check_branch
    %382 = sbr.rel (0) target = $region21
  $region20: #{gcn_forward.1} parent=0 // pred_region
    _
  $region21: #{gcn_forward.1} parent=0 // pred_fallthru
    _
  // Predicated region
  $region22: #{gcn_forward.1} parent=0 // pred_check
    _
  $region23: #{gcn_forward.1} parent=0 // pred_check_branch
    %384 = sbr.rel (0) target = $region25
  $region24: #{gcn_forward.1} parent=0 // pred_region
    _
  $region25: #{gcn_forward.1} parent=0 // pred_fallthru
    _

</llo_original>
